<compile_context>
chip_gen: v6e
topology: v6e:2x2x1
jax: 0.10.0
libtpu: 0.0.40
codegen_flags: <defaults>
</compile_context>

<pallas_src>
import math

import jax
import jax.numpy as jnp
from jax import lax
from jax.experimental import pallas as pl
from jax.experimental.pallas import tpu as pltpu


# --------------------------------------------------------------------------
# Chip / footprint helpers
# --------------------------------------------------------------------------
def _tensorcores_per_chip():
    """2 for v7x-class chips (two TensorCores per device), else 1 (v5e/v6e)."""
    try:
        d = jax.devices()[0]
        kind = (getattr(d, "device_kind", "") or "").lower()
        if "v7" in kind or "7x" in kind:
            return 2
    except Exception:
        pass
    return 1


def _maybe_vmem_limit(double_buffered_bytes, resident_bytes):
    """Only raise the scoped-VMEM limit when the footprint actually needs it
    (v5e's scoped default is 16 MiB); otherwise leave the compiler default."""
    need = int(1.25 * (double_buffered_bytes + resident_bytes)) + (1 << 20)
    if need > (16 << 20):
        return min(need, 60 << 20)   # stay under v7x's 64 MiB physical VMEM
    return None


def _compiler_params(vmem_limit):
    kwargs = dict(dimension_semantics=("parallel", "parallel"))
    if vmem_limit is not None:
        kwargs["vmem_limit_bytes"] = vmem_limit
    return pltpu.CompilerParams(**kwargs)


# --------------------------------------------------------------------------
# Fallback kernel: lane-dense 1x1 conv + ReLU (shuffle done by XLA outside)
# --------------------------------------------------------------------------
def conv1x1_relu_kernel(x_ref, w_ref, b_ref, o_ref):
    # x_ref: (C, TM)   w_ref: (Cout, C)   b_ref: (Cout, 1)   o_ref: (Cout, TM)
    x = x_ref[...]
    w = w_ref[...]
    k_dim = x.shape[0]

    # Accumulator starts as the broadcast bias: no zeros materialization+add.
    acc = jnp.broadcast_to(b_ref[...].astype(jnp.float32), o_ref.shape)

    if k_dim <= 32:
        # K is far below MXU contraction depth -> unrolled VPU FMA chain.
        # TODO(synk): on v7x the x-row sublane broadcasts could ride the vld
        # slot via stride-0 pl.ds loads if the VPU ever becomes the binding slot.
        for k in range(k_dim):
            acc = acc + (w[:, k:k + 1].astype(jnp.float32)
                         * x[k:k + 1, :].astype(jnp.float32))
    else:
        acc = acc + jnp.dot(w, x, preferred_element_type=jnp.float32)

    o_ref[...] = jnp.maximum(acc, 0.0).astype(o_ref.dtype)


def _divisor_tile(m, cap):
    """Largest multiple-of-128 divisor of m that is <= cap (None if none)."""
    best = None
    if m % 128 == 0:
        t = 128
        top = min(cap, m)
        while t <= top:
            if m % t == 0:
                best = t
            t += 128
    return best


def _choose_tm(m, batch, c_in, c_out, itemsize, ncores,
               budget=24 << 20, tm_max=32768):
    per_col = 2 * (c_in + c_out) * itemsize          # double-buffered in+out / lane
    cap = max(128, min(tm_max, (budget // per_col) // 128 * 128))
    tm = _divisor_tile(m, cap)
    if tm is None:                                   # ragged M: fall back to padding
        return min(cap, pl.cdiv(m, 128) * 128), True
    # Multi-TensorCore chips (v7x): make sure both cores get at least one step.
    if ncores >= 2 and batch * (m // tm) < ncores:
        smaller = _divisor_tile(m, max(128, tm // 2))
        if smaller is not None:
            tm = smaller
    return tm, False


def conv1x1_relu_nchw(x_bcm, weight, bias2d, ncores):
    """x_bcm: (B, C, M); weight: (Cout, C); bias2d: (Cout, 1).
    Returns (B, Cout, M) = relu(W @ x + b) per batch element."""
    B, C, M = x_bcm.shape
    Cout = weight.shape[0]
    itemsize = jnp.dtype(x_bcm.dtype).itemsize

    tm, padded = _choose_tm(M, B, C, Cout, itemsize, ncores)
    M_pad = pl.cdiv(M, tm) * tm
    if padded and M_pad != M:
        x_bcm = jnp.pad(x_bcm, ((0, 0), (0, 0), (0, M_pad - M)))
    n_tiles = M_pad // tm

    block_bytes = 2 * (C + Cout) * tm * itemsize     # double-buffered in+out blocks
    const_bytes = (Cout * C + Cout) * jnp.dtype(weight.dtype).itemsize
    vmem_limit = _maybe_vmem_limit(block_bytes, const_bytes)

    out = pl.pallas_call(
        conv1x1_relu_kernel,
        out_shape=jax.ShapeDtypeStruct((B, Cout, M_pad), x_bcm.dtype),
        grid_spec=pltpu.PrefetchScalarGridSpec(
            num_scalar_prefetch=0,
            grid=(B, n_tiles),
            in_specs=[
                pl.BlockSpec((None, C, tm), lambda b, i: (b, 0, i)),
                pl.BlockSpec((Cout, C), lambda b, i: (0, 0)),     # resident weight
                pl.BlockSpec((Cout, 1), lambda b, i: (0, 0)),     # resident bias
            ],
            out_specs=pl.BlockSpec((None, Cout, tm), lambda b, i: (b, 0, i)),
        ),
        compiler_params=_compiler_params(vmem_limit),
    )(x_bcm, weight, bias2d)

    if M_pad != M:
        out = out[:, :, :M]
    return out


# --------------------------------------------------------------------------
# Fused kernel: 1x1 conv + ReLU + pixel-shuffle written directly to NCHW out
# --------------------------------------------------------------------------
def _make_fused_kernel(c_in, scale):
    C, s = c_in, scale

    def kernel(x_ref, w_ref, b_ref, p_ref, q_ref, o_ref):
        # x_ref: (C, R, W) VMEM        w_ref: (C*s*s, C) SMEM   b_ref: (C*s*s,) SMEM
        # p_ref: (s, R*s, R) VMEM      q_ref: (s, W, W*s) VMEM
        # o_ref: (C, R*s, W*s) VMEM  -- already the pixel-shuffled layout.
        xs = [x_ref[k].astype(jnp.float32) for k in range(C)]     # each (R, W)
        ps = [p_ref[i] for i in range(s)]                         # (R*s, R)
        qs = [q_ref[j] for j in range(s)]                         # (W, W*s)
        for c in range(C):
            out_c = None
            for i in range(s):
                row_i = None                                      # (R, W*s)
                for j in range(s):
                    o_ch = (c * s + i) * s + j
                    v = jnp.full(xs[0].shape, b_ref[o_ch], dtype=jnp.float32)
                    for k in range(C):
                        v = v + w_ref[o_ch, k] * xs[k]            # scalar FMA (VPU)
                    v = jnp.maximum(v, 0.0)
                    # scatter columns w -> w*s + j (tiny 0/1 matmul on idle MXU)
                    t = jnp.dot(v, qs[j], preferred_element_type=jnp.float32)
                    row_i = t if row_i is None else row_i + t
                # scatter rows r -> r*s + i
                t = jnp.dot(ps[i], row_i, preferred_element_type=jnp.float32)
                out_c = t if out_c is None else out_c + t
            o_ref[c, :, :] = out_c.astype(o_ref.dtype)

    return kernel


def _shuffle_matrices(R, W, s):
    """0/1 scatter matrices used on the MXU to interleave sub-pixels.
    P[i, r*s + i, r] = 1   (row scatter)     shape (s, R*s, R)
    Q[j, w, w*s + j] = 1   (column scatter)  shape (s, W, W*s)
    """
    ii = jnp.arange(s)
    r_out, r_in = jnp.arange(R * s), jnp.arange(R)
    P = (r_out[None, :, None] ==
         (r_in[None, None, :] * s + ii[:, None, None])).astype(jnp.float32)
    w_in, w_out = jnp.arange(W), jnp.arange(W * s)
    Q = (w_out[None, None, :] ==
         (w_in[None, :, None] * s + ii[:, None, None])).astype(jnp.float32)
    return P, Q


def _choose_rows(H, W, B, C, s, itemsize, ncores,
                 budget=24 << 20, max_pixels=32768):
    """Rows per tile: as many whole image rows as the lane/VMEM budget allows,
    R | H and (R % 8 == 0 or R == H) so blocks stay layout-legal."""
    per_pix = 2 * C * (1 + s * s) * itemsize        # double-buffered in+out / pixel
    cap_pix = max(W, min(max_pixels, budget // max(1, per_pix)))
    r_cap = max(1, cap_pix // W)
    valid = [r for r in range(1, H + 1) if H % r == 0 and (r % 8 == 0 or r == H)]
    fits = [r for r in valid if r <= r_cap]
    R = max(fits) if fits else min(valid)
    # v7x: keep >= ncores grid steps when a further split is possible.
    if ncores >= 2:
        while B * (H // R) < ncores:
            smaller = [r for r in valid if r < R]
            if not smaller:
                break
            R = max(smaller)
    return R


def conv1x1_relu_shuffle_fused(x_nchw, weight, bias, scale, R):
    B, C, H, W = x_nchw.shape
    s = scale
    itemsize = jnp.dtype(x_nchw.dtype).itemsize
    n_tiles = H // R

    P, Q = _shuffle_matrices(R, W, s)
    w_f32 = weight.astype(jnp.float32)               # scalars consumed from SMEM
    b_f32 = bias.astype(jnp.float32)

    in_block = C * R * W * itemsize
    out_block = C * (R * s) * (W * s) * itemsize
    resident = (P.size + Q.size) * 4
    vmem_limit = _maybe_vmem_limit(2 * (in_block + out_block), resident)

    return pl.pallas_call(
        _make_fused_kernel(C, s),
        out_shape=jax.ShapeDtypeStruct((B, C, H * s, W * s), x_nchw.dtype),
        grid_spec=pltpu.PrefetchScalarGridSpec(
            num_scalar_prefetch=0,
            grid=(B, n_tiles),
            in_specs=[
                pl.BlockSpec((None, C, R, W), lambda b, t: (b, 0, t, 0)),
                pl.BlockSpec(memory_space=pltpu.MemorySpace.SMEM),    # weight
                pl.BlockSpec(memory_space=pltpu.MemorySpace.SMEM),    # bias
                pl.BlockSpec((s, R * s, R), lambda b, t: (0, 0, 0)),  # P (resident)
                pl.BlockSpec((s, W, W * s), lambda b, t: (0, 0, 0)),  # Q (resident)
            ],
            out_specs=pl.BlockSpec((None, C, R * s, W * s),
                                   lambda b, t: (b, 0, t, 0)),
        ),
        compiler_params=_compiler_params(vmem_limit),
    )(x_nchw, w_f32, b_f32, P, Q)


# --------------------------- Parameter init (ICNR) ---------------------------
def icnr_weight(key, n_channels, scale):
    """ICNR init for the (n_channels*scale^2, n_channels) 1x1-conv weight.
    Matches PyTorch icnr(): weight[o, i] = base[o // scale^2, i] with base
    kaiming_normal_ on a (C, C, 1, 1) tensor (fan_in = C)."""
    C = n_channels
    std = math.sqrt(2.0 / C)
    base = jax.random.normal(key, (C, C), dtype=jnp.float32) * std
    return jnp.repeat(base, scale ** 2, axis=0)      # (C*scale^2, C)


def conv_bias(key, n_channels, scale):
    """PyTorch Conv2d default bias init: U(-1/sqrt(fan_in), 1/sqrt(fan_in))."""
    bound = 1.0 / math.sqrt(n_channels)
    return jax.random.uniform(key, (n_channels * scale ** 2,), dtype=jnp.float32,
                              minval=-bound, maxval=bound)


# ------------------------------ Module forward --------------------------------
def pixel_shuffle_forward(x_nchw, weight, bias, scale):
    """x_nchw: (B, C, H, W); weight: (C*s^2, C); bias: (C*s^2,)
    Returns (B, C, H*s, W*s) == shuf(relu(conv1x1(x))) of the PyTorch module."""
    B, C, H, W = x_nchw.shape
    s = scale
    Cout = C * s * s
    itemsize = jnp.dtype(x_nchw.dtype).itemsize
    ncores = _tensorcores_per_chip()

    # Fused path: conv + relu + pixel-shuffle in one kernel whenever the
    # shuffled row (W*s) is lane-dense and the per-channel unroll is modest.
    if (W * s) % 128 == 0 and Cout * (C + 2) <= 2048:
        R = _choose_rows(H, W, B, C, s, itemsize, ncores)
        step_bytes = 2 * C * R * W * (1 + s * s) * itemsize
        if step_bytes <= (48 << 20):
            return conv1x1_relu_shuffle_fused(x_nchw, weight, bias, s, R)

    # Fallback: lane-dense transposed conv kernel + one XLA shuffle pass.
    x_bcm = x_nchw.reshape(B, C, H * W)              # free: NCHW is already (B,C,M)
    y = conv1x1_relu_nchw(x_bcm, weight, bias.reshape(Cout, 1), ncores)
    y = y.reshape(B, C, s, s, H, W)                  # (B, C, i, j, H, W)
    y = jnp.transpose(y, (0, 1, 4, 2, 5, 3))         # (B, C, H, i, W, j)
    return y.reshape(B, C, H * s, W * s)


# ------------------------------- Self-test ------------------------------------
def _reference(x, weight, bias, s):
    B, C, H, W = x.shape
    conv = jnp.einsum("bchw,oc->bohw", x, weight, precision=lax.Precision.HIGHEST)
    conv = jnp.maximum(conv + bias[None, :, None, None], 0.0)
    y = conv.reshape(B, C, s, s, H, W)
    return jnp.transpose(y, (0, 1, 4, 2, 5, 3)).reshape(B, C, H * s, W * s)


if __name__ == "__main__":
    scale = 2
    fwd = jax.jit(pixel_shuffle_forward, static_argnums=(3,))

    # 1) Module-spec shapes (W*s = 32 < 128 -> conv kernel + XLA shuffle path).
    B, C, H, W = 2, 4, 16, 16
    k_x, k_w, k_b = jax.random.split(jax.random.PRNGKey(0), 3)
    x = jax.random.normal(k_x, (B, C, H, W), dtype=jnp.float32)
    weight = icnr_weight(k_w, C, scale)      # (C*scale^2, C)
    bias = conv_bias(k_b, C, scale)          # (C*scale^2,)
    out = jax.block_until_ready(fwd(x, weight, bias, scale))
    assert out.shape == (B, C, H * scale, W * scale), out.shape
    assert jnp.allclose(out, _reference(x, weight, bias, scale),
                        atol=1e-4, rtol=1e-4)

    # 2) Lane-dense width (W*s = 128 -> fully fused conv+relu+shuffle kernel).
    B2, C2, H2, W2 = 1, 4, 8, 64
    k_x2, k_w2, k_b2 = jax.random.split(jax.random.PRNGKey(1), 3)
    x2 = jax.random.normal(k_x2, (B2, C2, H2, W2), dtype=jnp.float32)
    weight2 = icnr_weight(k_w2, C2, scale)
    bias2 = conv_bias(k_b2, C2, scale)
    out2 = jax.block_until_ready(fwd(x2, weight2, bias2, scale))
    assert out2.shape == (B2, C2, H2 * scale, W2 * scale), out2.shape
    assert jnp.allclose(out2, _reference(x2, weight2, bias2, scale),
                        atol=1e-4, rtol=1e-4)

    print("KERNEL_OK")
</pallas_src>

<mosaic_0001>
module attributes {stable_mosaic.version = 11 : i64} {
  func.func @conv1x1_relu_kernel(%arg0: i32, %arg1: i32, %arg2: memref<1x4x256xf32, #tpu.memory_space<vmem>>, %arg3: memref<16x4xf32, #tpu.memory_space<vmem>>, %arg4: memref<16x1xf32, #tpu.memory_space<vmem>>, %arg5: memref<1x16x256xf32, #tpu.memory_space<vmem>>) attributes {dimension_semantics = [#tpu.dimension_semantics<parallel>, #tpu.dimension_semantics<parallel>], iteration_bounds = array<i64: 2, 1>, scalar_prefetch = 0 : i64, scratch_operands = 0 : i64, tpu.core_type = #tpu.core_type<tc>, window_params = [{transform_indices = @transform_0, window_bounds = array<i64: 1, 4, 256>}, {pipeline_mode = #tpu.pipeline_mode<synchronous>, transform_indices = @transform_1, window_bounds = array<i64: 16, 4>}, {pipeline_mode = #tpu.pipeline_mode<synchronous>, transform_indices = @transform_2, window_bounds = array<i64: 16, 1>}, {transform_indices = @transform_3, window_bounds = array<i64: 1, 16, 256>}]} {
    %c0 = arith.constant 0 : index
    %c0_0 = arith.constant 0 : index
    %c0_1 = arith.constant 0 : index
    %0 = vector.load %arg2[%c0, %c0_0, %c0_1] : memref<1x4x256xf32, #tpu.memory_space<vmem>>, vector<1x4x256xf32>
    %1 = vector.shape_cast %0 : vector<1x4x256xf32> to vector<4x256xf32>
    %c0_2 = arith.constant 0 : index
    %c0_3 = arith.constant 0 : index
    %2 = vector.load %arg3[%c0_2, %c0_3] : memref<16x4xf32, #tpu.memory_space<vmem>>, vector<16x4xf32>
    %c0_4 = arith.constant 0 : index
    %c0_5 = arith.constant 0 : index
    %3 = vector.load %arg4[%c0_4, %c0_5] : memref<16x1xf32, #tpu.memory_space<vmem>>, vector<16x1xf32>
    %4 = vector.shape_cast %3 : vector<16x1xf32> to vector<16x1xf32>
    %5 = vector.broadcast %4 : vector<16x1xf32> to vector<16x256xf32>
    %6 = vector.extract_strided_slice %2 {offsets = [0, 0], sizes = [16, 1], strides = [1, 1]} : vector<16x4xf32> to vector<16x1xf32>
    %7 = vector.extract_strided_slice %1 {offsets = [0, 0], sizes = [1, 256], strides = [1, 1]} : vector<4x256xf32> to vector<1x256xf32>
    %8 = vector.broadcast %6 : vector<16x1xf32> to vector<16x256xf32>
    %9 = vector.broadcast %7 : vector<1x256xf32> to vector<16x256xf32>
    %10 = arith.mulf %8, %9 : vector<16x256xf32>
    %11 = arith.addf %5, %10 : vector<16x256xf32>
    %12 = vector.extract_strided_slice %2 {offsets = [0, 1], sizes = [16, 1], strides = [1, 1]} : vector<16x4xf32> to vector<16x1xf32>
    %13 = vector.extract_strided_slice %1 {offsets = [1, 0], sizes = [1, 256], strides = [1, 1]} : vector<4x256xf32> to vector<1x256xf32>
    %14 = vector.broadcast %12 : vector<16x1xf32> to vector<16x256xf32>
    %15 = vector.broadcast %13 : vector<1x256xf32> to vector<16x256xf32>
    %16 = arith.mulf %14, %15 : vector<16x256xf32>
    %17 = arith.addf %11, %16 : vector<16x256xf32>
    %18 = vector.extract_strided_slice %2 {offsets = [0, 2], sizes = [16, 1], strides = [1, 1]} : vector<16x4xf32> to vector<16x1xf32>
    %19 = vector.extract_strided_slice %1 {offsets = [2, 0], sizes = [1, 256], strides = [1, 1]} : vector<4x256xf32> to vector<1x256xf32>
    %20 = vector.broadcast %18 : vector<16x1xf32> to vector<16x256xf32>
    %21 = vector.broadcast %19 : vector<1x256xf32> to vector<16x256xf32>
    %22 = arith.mulf %20, %21 : vector<16x256xf32>
    %23 = arith.addf %17, %22 : vector<16x256xf32>
    %24 = vector.extract_strided_slice %2 {offsets = [0, 3], sizes = [16, 1], strides = [1, 1]} : vector<16x4xf32> to vector<16x1xf32>
    %25 = vector.extract_strided_slice %1 {offsets = [3, 0], sizes = [1, 256], strides = [1, 1]} : vector<4x256xf32> to vector<1x256xf32>
    %26 = vector.broadcast %24 : vector<16x1xf32> to vector<16x256xf32>
    %27 = vector.broadcast %25 : vector<1x256xf32> to vector<16x256xf32>
    %28 = arith.mulf %26, %27 : vector<16x256xf32>
    %29 = arith.addf %23, %28 : vector<16x256xf32>
    %cst = arith.constant 0.000000e+00 : f32
    %30 = vector.broadcast %cst : f32 to vector<16x256xf32>
    %31 = arith.maximumf %29, %30 : vector<16x256xf32>
    %c0_6 = arith.constant 0 : index
    %c0_7 = arith.constant 0 : index
    %c0_8 = arith.constant 0 : index
    %32 = vector.load %arg5[%c0_6, %c0_7, %c0_8] : memref<1x16x256xf32, #tpu.memory_space<vmem>>, vector<1x16x256xf32>
    %33 = vector.shape_cast %32 : vector<1x16x256xf32> to vector<16x256xf32>
    %34 = vector.shape_cast %31 : vector<16x256xf32> to vector<1x16x256xf32>
    tpu.vector_store %arg5[%c0_6, %c0_7, %c0_8], %34 {strides = array<i32>} : memref<1x16x256xf32, #tpu.memory_space<vmem>>, vector<1x16x256xf32>,
    return
  }
  func.func @transform_0(%arg0: i32, %arg1: i32) -> (i32, i32, i32) {
    %c0_i32 = arith.constant 0 : i32
    %c0_i32_0 = arith.constant 0 : i32
    return %arg0, %c0_i32, %arg1 : i32, i32, i32
  }
  func.func @transform_1(%arg0: i32, %arg1: i32) -> (i32, i32) {
    %c0_i32 = arith.constant 0 : i32
    %c0_i32_0 = arith.constant 0 : i32
    %c0_i32_1 = arith.constant 0 : i32
    return %c0_i32, %c0_i32_0 : i32, i32
  }
  func.func @transform_2(%arg0: i32, %arg1: i32) -> (i32, i32) {
    %c0_i32 = arith.constant 0 : i32
    %c0_i32_0 = arith.constant 0 : i32
    %c0_i32_1 = arith.constant 0 : i32
    return %c0_i32, %c0_i32_0 : i32, i32
  }
  func.func @transform_3(%arg0: i32, %arg1: i32) -> (i32, i32, i32) {
    %c0_i32 = arith.constant 0 : i32
    %c0_i32_0 = arith.constant 0 : i32
    return %arg0, %c0_i32, %arg1 : i32, i32, i32
  }
}

</mosaic_0001>

<llo_original>
// kernel: pixel_shuffle_forward.1
$region0: #{pixel_shuffle_forward.1}
  #allocation0 [shape = 'u32[]', space=smem, size = 0x4, offset = 0x4, fixed_abs, tag = 'smem constant byte address 0x4 - core index']
  #allocation1 [shape = 'u32[144,128]{1,0:T(1,128)}', space=vmem, size = 0x12000, scoped, tag = 'internal scratch']
  %s0 = inlined_call_operand.vmem [shape: f32[2,4,256], index: 0, kind: input, shape index: {}]
  %s1 = inlined_call_operand.vmem [shape: f32[16,4], index: 1, kind: input, shape index: {}]
  %s2 = inlined_call_operand.vmem [shape: f32[16,1], index: 2, kind: input, shape index: {}]
  %s3 = inlined_call_operand.vmem [shape: f32[2,16,256], index: 3, kind: output, shape index: {}]
  %s4 = sld [smem:[#allocation0]]
  $region45: #{pixel_shuffle_forward.1} parent=0
    _
  %s6 = ssub.s32 1, %s4
  %s7 = scalar_select 0, %s6, %s4
  loop: start=0, step=1, limit=4
  $region2: #{pixel_shuffle_forward.1} parent=0 // loop_pre_header
    _
  $region3: #{pixel_shuffle_forward.1} parent=0 // loop_header
    %s9 = sphi 0, %s13
    %p10 = scmp.ge.s32.totalorder %s9, 4
    %s16 = sphi 0, %s28
    %s17 = sphi 0, %s24
    %s18 = sphi 0, %s16
    %s19 = sphi 0, %s17
    %s20 = sphi 0, %s18
    %s21 = sphi 0, %s19
    %s33 = sphi 0, %s35
    %s36 = sphi 0, %s33
    %s37 = sphi 0, %s36
    %s53 = sphi 0, %s37
    %s57 = sphi 0, %s57
    %s59 = sphi 0, %s57
    %s60 = sphi 0, %s59
    %s74 = sphi 0, %s60
    %s78 = sphi 0, %s78
    %s80 = sphi 0, %s78
    %s81 = sphi 0, %s80
    %s95 = sphi 0, %s81
    %s103 = sphi 0, %s105
    %s106 = sphi 0, %s103
    %s107 = sphi 0, %s106
    %s123 = sphi 0, %s107
  $region4: #{pixel_shuffle_forward.1} parent=0 // loop_header_branch
    %12 = sbr.rel (%p10) target = $region8
  $region5: #{pixel_shuffle_forward.1} parent=0 // loop_body
    %s14 = ssub.s32 %s9, 1
    %s15 = ssub.s32 %s9, 2
    %s22 = sadd.s32 1, %s17
    %p23 = scmp.ge.s32.totalorder %s22, 1
    %s24 = scalar_select %p23, 0, %s22
    %s25 = sadd.s32 1, %s16
    %s26 = scalar_select %p23, %s25, %s16
    %p27 = scmp.ge.s32.totalorder %s26, 2
    %s28 = scalar_select %p27, 0, %s26
    %s29 = ssub.s32 %s16, %s28
    %s30 = ssub.s32 %s17, %s24
    %s31 = sor.u32 %s29, %s30
    %p32 = scmp.eq.s32.totalorder %s31, 0
    %s34 = sadd.s32 %s33, 1
    %s35 = scalar_select %p32, %s33, %s34
    %p38 = pneg %p32
    %p39 = scmp.eq.s32.totalorder %s9, 1
    %p40 = por %p38, %p39
    %p41 = scmp.ne.s32.totalorder %s33, %s36
    %p42 = scmp.eq.s32.totalorder %s9, 0
    %p43 = por %p41, %p42
    %p44 = scmp.ne.s32.totalorder %s33, %s36
    %p45 = scmp.eq.s32.totalorder %s14, 1
    %p46 = por %p44, %p45
    %p47 = scmp.ne.s32.totalorder %s36, %s37
    %p48 = scmp.eq.s32.totalorder %s14, 0
    %p49 = por %p47, %p48
    %p50 = scmp.ne.s32.totalorder %s36, %s37
    %p51 = scmp.eq.s32.totalorder %s15, 1
    %p52 = por %p50, %p51
    %p54 = scmp.ne.s32.totalorder %s37, %s53
    %p55 = scmp.eq.s32.totalorder %s15, 0
    %p56 = por %p54, %p55
    %s58 = sadd.s32 %s57, 1
    %p61 = scmp.eq.s32.totalorder %s9, 1
    %p62 = scmp.ne.s32.totalorder %s57, %s59
    %p63 = scmp.eq.s32.totalorder %s9, 0
    %p64 = por %p62, %p63
    %p65 = scmp.ne.s32.totalorder %s57, %s59
    %p66 = scmp.eq.s32.totalorder %s14, 1
    %p67 = por %p65, %p66
    %p68 = scmp.ne.s32.totalorder %s59, %s60
    %p69 = scmp.eq.s32.totalorder %s14, 0
    %p70 = por %p68, %p69
    %p71 = scmp.ne.s32.totalorder %s59, %s60
    %p72 = scmp.eq.s32.totalorder %s15, 1
    %p73 = por %p71, %p72
    %p75 = scmp.ne.s32.totalorder %s60, %s74
    %p76 = scmp.eq.s32.totalorder %s15, 0
    %p77 = por %p75, %p76
    %s79 = sadd.s32 %s78, 1
    %p82 = scmp.eq.s32.totalorder %s9, 1
    %p83 = scmp.ne.s32.totalorder %s78, %s80
    %p84 = scmp.eq.s32.totalorder %s9, 0
    %p85 = por %p83, %p84
    %p86 = scmp.ne.s32.totalorder %s78, %s80
    %p87 = scmp.eq.s32.totalorder %s14, 1
    %p88 = por %p86, %p87
    %p89 = scmp.ne.s32.totalorder %s80, %s81
    %p90 = scmp.eq.s32.totalorder %s14, 0
    %p91 = por %p89, %p90
    %p92 = scmp.ne.s32.totalorder %s80, %s81
    %p93 = scmp.eq.s32.totalorder %s15, 1
    %p94 = por %p92, %p93
    %p96 = scmp.ne.s32.totalorder %s81, %s95
    %p97 = scmp.eq.s32.totalorder %s15, 0
    %p98 = por %p96, %p97
    %s99 = ssub.s32 %s16, %s28
    %s100 = ssub.s32 %s17, %s24
    %s101 = sor.u32 %s99, %s100
    %p102 = scmp.eq.s32.totalorder %s101, 0
    %s104 = sadd.s32 %s103, 1
    %s105 = scalar_select %p102, %s103, %s104
    %p108 = pneg %p102
    %p109 = scmp.eq.s32.totalorder %s9, 1
    %p110 = por %p108, %p109
    %p111 = scmp.ne.s32.totalorder %s103, %s106
    %p112 = scmp.eq.s32.totalorder %s9, 0
    %p113 = por %p111, %p112
    %p114 = scmp.ne.s32.totalorder %s103, %s106
    %p115 = scmp.eq.s32.totalorder %s14, 1
    %p116 = por %p114, %p115
    %p117 = scmp.ne.s32.totalorder %s106, %s107
    %p118 = scmp.eq.s32.totalorder %s14, 0
    %p119 = por %p117, %p118
    %p120 = scmp.ne.s32.totalorder %s106, %s107
    %p121 = scmp.eq.s32.totalorder %s15, 1
    %p122 = por %p120, %p121
    %p124 = scmp.ne.s32.totalorder %s107, %s123
    %p125 = scmp.eq.s32.totalorder %s15, 0
    %p126 = por %p124, %p125
    %p127 = scmp.le.s32.totalorder 1, %s9
    %p128 = scmp.lt.s32.totalorder %s9, 3
    %p129 = pnand %p127, %p128
    %p130 = pneg %p129
    // Predicated region
    $region9: #{pixel_shuffle_forward.1} parent=5 // pred_check
      _
    $region10: #{pixel_shuffle_forward.1} parent=5 // pred_check_branch
      %132 = sbr.rel (%p129) target = $region12
    $region11: #{pixel_shuffle_forward.1} parent=5 // pred_region
      %s133 = ssub.s32 %s9, 1
      // Predicated region
      $region13: #{pixel_shuffle_forward.1} parent=11 // pred_check
        %p134 = pneg %p70
      $region14: #{pixel_shuffle_forward.1} parent=11 // pred_check_branch
        %136 = sbr.rel (%p134) target = $region16
      $region15: #{pixel_shuffle_forward.1} parent=11 // pred_region
        _
      $region16: #{pixel_shuffle_forward.1} parent=11 // pred_fallthru
        _
      // Predicated region
      $region17: #{pixel_shuffle_forward.1} parent=11 // pred_check
        %p137 = pneg %p91
      $region18: #{pixel_shuffle_forward.1} parent=11 // pred_check_branch
        %139 = sbr.rel (%p137) target = $region20
      $region19: #{pixel_shuffle_forward.1} parent=11 // pred_region
        _
      $region20: #{pixel_shuffle_forward.1} parent=11 // pred_fallthru
        _
    $region12: #{pixel_shuffle_forward.1} parent=5 // pred_fallthru
      _
    %p140 = scmp.lt.s32.totalorder %s9, 2
    // Predicated region
    $region21: #{pixel_shuffle_forward.1} parent=5 // pred_check
      %p141 = pneg %p140
    $region22: #{pixel_shuffle_forward.1} parent=5 // pred_check_branch
      %143 = sbr.rel (%p141) target = $region24
    $region23: #{pixel_shuffle_forward.1} parent=5 // pred_region
      // Predicated region
      $region25: #{pixel_shuffle_forward.1} parent=23 // pred_check
        %p144 = pneg %p43
      $region26: #{pixel_shuffle_forward.1} parent=23 // pred_check_branch
        %146 = sbr.rel (%p144) target = $region28
      $region27: #{pixel_shuffle_forward.1} parent=23 // pred_region
        %s147 = smul.u32 2, %s17
        %p148 = scmp.lt.s32.totalorder %s16, 1
        %s149 = scalar_select %p148, %s16, 1
        %p150 = scmp.lt.s32.totalorder %s147, 1
        %s151 = scalar_select %p150, %s147, 1
        %s152 = smul.addr %s149, 2
        %s153 = sadd.s32 %s151, %s152
        %s154 = smul.addr %s153, 4
        %s155 = scalar_lea.vmem %s0, %s154
        %s156 = smul.u32 2, %s17
      $region28: #{pixel_shuffle_forward.1} parent=23 // pred_fallthru
        _
    $region24: #{pixel_shuffle_forward.1} parent=5 // pred_fallthru
      _
    %p157 = scmp.le.s32.totalorder 1, %s9
    %p158 = scmp.lt.s32.totalorder %s9, 3
    %p159 = pnand %p157, %p158
    %p160 = pneg %p159
    // Predicated region
    $region29: #{pixel_shuffle_forward.1} parent=5 // pred_check
      _
    $region30: #{pixel_shuffle_forward.1} parent=5 // pred_check_branch
      %162 = sbr.rel (%p159) target = $region32
    $region31: #{pixel_shuffle_forward.1} parent=5 // pred_region
      %s163 = ssub.s32 %s9, 1
      %s164 = smul.u32 2, %s19
      %p165 = scmp.lt.s32.totalorder %s18, 1
      %s166 = scalar_select %p165, %s18, 1
      %p167 = scmp.lt.s32.totalorder %s164, 1
      %s168 = scalar_select %p167, %s164, 1
      %s169 = smul.addr %s166, 2
      %s170 = sadd.s32 %s168, %s169
      %s171 = smul.addr %s170, 4
      %s172 = scalar_lea.vmem %s0, %s171
      %p173 = pneg %p49
      %p174 = pneg %p46
      %p175 = pneg %p70
      %p176 = pneg %p67
      %p177 = pneg %p91
      %p178 = pneg %p88
      %p179 = pneg %p119
      %p180 = pneg %p116
      %s181 = smul.u32 2, %s19
      %p182 = scmp.lt.s32.totalorder %s18, 1
      %s183 = scalar_select %p182, %s18, 1
      %p184 = scmp.lt.s32.totalorder %s181, 1
      %s185 = scalar_select %p184, %s181, 1
      %s186 = smul.addr %s183, 4
      %s187 = sadd.s32 %s185, %s186
      %s188 = smul.addr %s187, 8
      %s189 = scalar_lea.vmem %s3, %s188
      %s190 = smul.u32 2, %s19
      %p191 = scmp.lt.s32.totalorder %s18, 1
      %s192 = scalar_select %p191, %s18, 1
      %p193 = scmp.lt.s32.totalorder %s190, 1
      %s194 = scalar_select %p193, %s190, 1
      %s195 = smul.addr %s192, 2
      %s196 = sadd.s32 %s194, %s195
      %s197 = smul.addr %s196, 4
      %s198 = scalar_lea.vmem %s0, %s197
      %s199 = smul.u32 2, %s19
      %s200 = smul.u32 2, %s19
      %p201 = scmp.lt.s32.totalorder %s18, 1
      %s202 = scalar_select %p201, %s18, 1
      %p203 = scmp.lt.s32.totalorder %s200, 1
      %s204 = scalar_select %p203, %s200, 1
      %s205 = smul.addr %s202, 4
      %s206 = sadd.s32 %s204, %s205
      %s207 = smul.addr %s206, 8
      %s208 = scalar_lea.vmem %s3, %s207
      %s209 = smul.u32 2, %s19
      %v210 = vld [vmem:[%s198] sm:$0xff]
      %v211 = vld [vmem:[%s1] sm:$0xff]
      %v212 = vld [vmem:[%s1 + $0x8] sm:$0xff]
      %v213 = vld [vmem:[%s2] sm:$0xff]
      %v214 = vld [vmem:[%s2 + $0x8] sm:$0xff]
      %216 = vset.pattern.permute.xlu0 0
      %217 = vperm.xlu0 %216, %v213
      %v218 = vpop.permute.xlu0 %217
      %221 = vset.pattern.permute.xlu0 0
      %222 = vperm.xlu0 %221, %v214
      %v223 = vpop.permute.xlu0 %222
      %226 = vset.pattern.permute.xlu0 0
      %227 = vperm.xlu0 %226, %v211
      %v228 = vpop.permute.xlu0 %227
      %231 = vset.pattern.permute.xlu0 0
      %232 = vperm.xlu0 %231, %v212
      %v233 = vpop.permute.xlu0 %232
      %v236 = vlaneseq
      %v237 = vshrl.u32 %v236, 7
      %v238 = vsub.s32 0, %v237
      %v239 = vrot.slane %v210, %v238
      %v240 = vlaneseq
      %v241 = vshrl.u32 %v240, 7
      %v242 = vsub.s32 4, %v241
      %v243 = vrot.slane %v210, %v242
      %v246 = vlaneseq
      %v247 = vshrl.u32 %v246, 7
      %v248 = vsub.s32 0, %v247
      %v249 = vrot.slane %v239, %v248
      %v250 = vlaneseq
      %v251 = vshrl.u32 %v250, 7
      %v252 = vsub.s32 0, %v251
      %v253 = vrot.slane %v243, %v252
      %v254 = vmul.f32 %v228, %v249
      %v255 = vmul.f32 %v228, %v253
      %v256 = vmul.f32 %v233, %v249
      %v257 = vmul.f32 %v233, %v253
      %v258 = vadd.f32 %v218, %v254
      %v259 = vadd.f32 %v218, %v255
      %v260 = vadd.f32 %v223, %v256
      %v261 = vadd.f32 %v223, %v257
      %262 = vset.pattern.permute.xlu0 1
      %263 = vperm.xlu0 %262, %v211
      %v264 = vpop.permute.xlu0 %263
      %266 = vset.pattern.permute.xlu0 1
      %267 = vperm.xlu0 %266, %v212
      %v268 = vpop.permute.xlu0 %267
      %v270 = vlaneseq
      %v271 = vshrl.u32 %v270, 7
      %v272 = vsub.s32 1, %v271
      %v273 = vrot.slane %v210, %v272
      %v274 = vlaneseq
      %v275 = vshrl.u32 %v274, 7
      %v276 = vsub.s32 5, %v275
      %v277 = vrot.slane %v210, %v276
      %v280 = vlaneseq
      %v281 = vshrl.u32 %v280, 7
      %v282 = vsub.s32 1, %v281
      %v283 = vrot.slane %v273, %v282
      %v284 = vlaneseq
      %v285 = vshrl.u32 %v284, 7
      %v286 = vsub.s32 1, %v285
      %v287 = vrot.slane %v277, %v286
      %v288 = vmul.f32 %v264, %v283
      %v289 = vmul.f32 %v264, %v287
      %v290 = vmul.f32 %v268, %v283
      %v291 = vmul.f32 %v268, %v287
      %v292 = vadd.f32 %v258, %v288
      %v293 = vadd.f32 %v259, %v289
      %v294 = vadd.f32 %v260, %v290
      %v295 = vadd.f32 %v261, %v291
      %296 = vset.pattern.permute.xlu0 2
      %297 = vperm.xlu0 %296, %v211
      %v298 = vpop.permute.xlu0 %297
      %300 = vset.pattern.permute.xlu0 2
      %301 = vperm.xlu0 %300, %v212
      %v302 = vpop.permute.xlu0 %301
      %v304 = vlaneseq
      %v305 = vshrl.u32 %v304, 7
      %v306 = vsub.s32 2, %v305
      %v307 = vrot.slane %v210, %v306
      %v308 = vlaneseq
      %v309 = vshrl.u32 %v308, 7
      %v310 = vsub.s32 6, %v309
      %v311 = vrot.slane %v210, %v310
      %v314 = vlaneseq
      %v315 = vshrl.u32 %v314, 7
      %v316 = vsub.s32 2, %v315
      %v317 = vrot.slane %v307, %v316
      %v318 = vlaneseq
      %v319 = vshrl.u32 %v318, 7
      %v320 = vsub.s32 2, %v319
      %v321 = vrot.slane %v311, %v320
      %v322 = vmul.f32 %v298, %v317
      %v323 = vmul.f32 %v298, %v321
      %v324 = vmul.f32 %v302, %v317
      %v325 = vmul.f32 %v302, %v321
      %v326 = vadd.f32 %v292, %v322
      %v327 = vadd.f32 %v293, %v323
      %v328 = vadd.f32 %v294, %v324
      %v329 = vadd.f32 %v295, %v325
      %330 = vset.pattern.permute.xlu0 3
      %331 = vperm.xlu0 %330, %v211
      %v332 = vpop.permute.xlu0 %331
      %334 = vset.pattern.permute.xlu0 3
      %335 = vperm.xlu0 %334, %v212
      %v336 = vpop.permute.xlu0 %335
      %v338 = vlaneseq
      %v339 = vshrl.u32 %v338, 7
      %v340 = vsub.s32 3, %v339
      %v341 = vrot.slane %v210, %v340
      %v342 = vlaneseq
      %v343 = vshrl.u32 %v342, 7
      %v344 = vsub.s32 7, %v343
      %v345 = vrot.slane %v210, %v344
      %v348 = vlaneseq
      %v349 = vshrl.u32 %v348, 7
      %v350 = vsub.s32 3, %v349
      %v351 = vrot.slane %v341, %v350
      %v352 = vlaneseq
      %v353 = vshrl.u32 %v352, 7
      %v354 = vsub.s32 3, %v353
      %v355 = vrot.slane %v345, %v354
      %v356 = vmul.f32 %v332, %v351
      %v357 = vmul.f32 %v332, %v355
      %v358 = vmul.f32 %v336, %v351
      %v359 = vmul.f32 %v336, %v355
      %v360 = vadd.f32 %v326, %v356
      %v361 = vadd.f32 %v327, %v357
      %v362 = vadd.f32 %v328, %v358
      %v363 = vadd.f32 %v329, %v359
      %v364 = vmax.f32 %v360, 0.0
      %v365 = vmax.f32 %v361, 0.0
      %v366 = vmax.f32 %v362, 0.0
      %v367 = vmax.f32 %v363, 0.0
      %368 = vst [vmem:[%s208] sm:$0xff] %v364
      %369 = vst [vmem:[%s208 + $0x8] sm:$0xff] %v365
      %370 = vst [vmem:[%s208 + $0x10] sm:$0xff] %v366
      %371 = vst [vmem:[%s208 + $0x18] sm:$0xff] %v367
      %s372 = smul.u32 2, %s19
      %p373 = scmp.lt.s32.totalorder %s18, 1
      %s374 = scalar_select %p373, %s18, 1
      %p375 = scmp.lt.s32.totalorder %s372, 1
      %s376 = scalar_select %p375, %s372, 1
      %s377 = smul.addr %s374, 4
      %s378 = sadd.s32 %s376, %s377
      %s379 = smul.addr %s378, 8
      %s380 = scalar_lea.vmem %s3, %s379
      // Predicated region
      $region33: #{pixel_shuffle_forward.1} parent=31 // pred_check
        %p381 = pneg %p116
      $region34: #{pixel_shuffle_forward.1} parent=31 // pred_check_branch
        %383 = sbr.rel (%p381) target = $region36
      $region35: #{pixel_shuffle_forward.1} parent=31 // pred_region
        %s384 = smul.u32 2, %s19
      $region36: #{pixel_shuffle_forward.1} parent=31 // pred_fallthru
        _
    $region32: #{pixel_shuffle_forward.1} parent=5 // pred_fallthru
      _
    %p385 = scmp.le.s32.totalorder 2, %s9
    // Predicated region
    $region37: #{pixel_shuffle_forward.1} parent=5 // pred_check
      %p386 = pneg %p385
    $region38: #{pixel_shuffle_forward.1} parent=5 // pred_check_branch
      %388 = sbr.rel (%p386) target = $region40
    $region39: #{pixel_shuffle_forward.1} parent=5 // pred_region
      %s389 = ssub.s32 %s9, 2
      // Predicated region
      $region41: #{pixel_shuffle_forward.1} parent=39 // pred_check
        %p390 = pneg %p122
      $region42: #{pixel_shuffle_forward.1} parent=39 // pred_check_branch
        %392 = sbr.rel (%p390) target = $region44
      $region43: #{pixel_shuffle_forward.1} parent=39 // pred_region
        %s393 = smul.u32 2, %s21
        %p394 = scmp.lt.s32.totalorder %s20, 1
        %s395 = scalar_select %p394, %s20, 1
        %p396 = scmp.lt.s32.totalorder %s393, 1
        %s397 = scalar_select %p396, %s393, 1
        %s398 = smul.addr %s395, 4
        %s399 = sadd.s32 %s397, %s398
        %s400 = smul.addr %s399, 8
        %s401 = scalar_lea.vmem %s3, %s400
      $region44: #{pixel_shuffle_forward.1} parent=39 // pred_fallthru
        _
    $region40: #{pixel_shuffle_forward.1} parent=5 // pred_fallthru
      _
  $region6: #{pixel_shuffle_forward.1} parent=0 // loop_footer
    %s13 = sadd.s32 1, %s9
  $region7: #{pixel_shuffle_forward.1} parent=0 // loop_footer_branch
    %8 = sbr.rel target = $region3
  $region8: #{pixel_shuffle_forward.1} parent=0 // loop_exit
    _

</llo_original>
